<compile_context>
chip_gen: v7x
topology: tpu7x:2x2x1
jax: 0.10.0
libtpu: 0.0.40
codegen_flags: <defaults>
</compile_context>

<pallas_src>
import math

import jax
import jax.numpy as jnp
from jax.experimental import pallas as pl
from jax.experimental.pallas import tpu as pltpu


# --------------------------------------------------------------------------
# Path 1: lane-dense tiled VMEM copy
# --------------------------------------------------------------------------

def _copy_kernel(x_ref, o_ref):
    # Identity copy of one lane-dense tile of the flattened buffer; a reshape
    # preserves row-major element order, so copying the flat buffer is exact.
    o_ref[...] = x_ref[...]


_MAX_BLOCK_BYTES = 16 * 1024 * 1024   # absolute cap on one block
_MIN_BLOCK_BYTES = 1 * 1024 * 1024


def _vmem_budget_bytes():
    """Generation-aware VMEM budget (leaves ~25% headroom)."""
    cap = 64 * 1024 * 1024  # conservative default (v7x per-TC VMEM)
    try:
        info = pltpu.get_tpu_info()
        cap = int(getattr(info, "vmem_capacity_bytes", cap)) or cap
    except Exception:
        pass
    budget = min((cap * 3) // 4, 96 * 1024 * 1024)
    return max(budget, 8 * 1024 * 1024)


def _block_bytes(budget):
    # Double-buffered input + output -> footprint is ~4x block bytes.
    return max(_MIN_BLOCK_BYTES, min(budget // 4, _MAX_BLOCK_BYTES))


def _sublane_multiple(itemsize):
    # Sub-32-bit dtypes pack along sublanes: f32 -> 8, bf16 -> 16, int8 -> 32.
    return 8 * max(1, 4 // int(itemsize))


def _divisors(n):
    divs = set()
    i = 1
    while i * i <= n:
        if n % i == 0:
            divs.add(i)
            divs.add(n // i)
        i += 1
    return sorted(divs)


def _choose_tiling(n_elems, itemsize, block_bytes):
    """Pick (rows, lane, block_rows) for a lane-dense tiled copy, or None."""
    lane = None
    for cand in (1024, 512, 256, 128):
        if n_elems % cand == 0:
            lane = cand
            break
    if lane is None:
        return None  # not 128-divisible; caller uses the HBM->HBM DMA path
    rows = n_elems // lane
    sub = _sublane_multiple(itemsize)
    max_rows = max(1, block_bytes // (lane * itemsize))

    if rows % sub != 0:
        # Only legal block along the sublane dim is the full extent.
        if rows * lane * itemsize <= block_bytes:
            return rows, lane, rows
        return None

    # Largest divisor of rows that is a multiple of the sublane granularity
    # and fits the byte cap; prefer >=2 grid steps so the "parallel" axis can
    # shard DMA issue across v7x's two TensorCores.
    cands = [d for d in _divisors(rows) if d % sub == 0 and d <= max_rows]
    if not cands:
        return None
    multi = [d for d in cands if rows // d >= 2]
    block_rows = max(multi) if multi else max(cands)
    return rows, lane, block_rows


def _pallas_flat_copy(flat, block_rows, vmem_limit_bytes):
    rows, lane = flat.shape
    n_bytes = rows * lane * jnp.dtype(flat.dtype).itemsize
    return pl.pallas_call(
        _copy_kernel,
        out_shape=jax.ShapeDtypeStruct((rows, lane), flat.dtype),
        grid=(rows // block_rows,),
        in_specs=[pl.BlockSpec((block_rows, lane), lambda i: (i, 0))],
        out_specs=pl.BlockSpec((block_rows, lane), lambda i: (i, 0)),
        compiler_params=pltpu.CompilerParams(
            dimension_semantics=("parallel",),
            vmem_limit_bytes=int(vmem_limit_bytes)),
        cost_estimate=pl.CostEstimate(
            flops=0, transcendentals=0, bytes_accessed=2 * n_bytes),
    )(flat)


# --------------------------------------------------------------------------
# Path 2: chunked HBM->HBM DMA copy (no VMEM, no divisibility requirement)
# --------------------------------------------------------------------------

def _make_dma_copy_kernel(chunk_bounds):
    def kernel(x_ref, o_ref, sems):
        copies = []
        for i, (start, size) in enumerate(chunk_bounds):
            cp = pltpu.make_async_copy(
                x_ref.at[pl.ds(start, size)],
                o_ref.at[pl.ds(start, size)],
                sems.at[i])
            cp.start()
            copies.append(cp)
        for cp in copies:
            cp.wait()
    return kernel


def _pallas_hbm_dma_copy(flat_1d):
    (n,) = flat_1d.shape
    itemsize = jnp.dtype(flat_1d.dtype).itemsize
    n_bytes = n * itemsize

    # A few in-flight DMAs (chunk boundaries 1024-element aligned where
    # possible); for small buffers a single DMA is enough.
    n_chunks = min(4, max(1, n_bytes // (1024 * 1024)))
    n_chunks = int(min(n_chunks, n))
    base = -(-n // n_chunks)
    base = -(-base // 1024) * 1024
    bounds = []
    start = 0
    while start < n:
        size = min(base, n - start)
        bounds.append((start, size))
        start += size

    kernel = _make_dma_copy_kernel(bounds)
    return pl.pallas_call(
        kernel,
        out_shape=jax.ShapeDtypeStruct((n,), flat_1d.dtype),
        in_specs=[pl.BlockSpec(memory_space=pl.ANY)],
        out_specs=pl.BlockSpec(memory_space=pl.ANY),
        scratch_shapes=[pltpu.SemaphoreType.DMA((len(bounds),))],
        cost_estimate=pl.CostEstimate(
            flops=0, transcendentals=0, bytes_accessed=2 * n_bytes),
    )(flat_1d)


# --------------------------------------------------------------------------
# Public wrapper
# --------------------------------------------------------------------------

def reshape_forward(x, shape, *, materialize=False):
    """Pallas/JAX equivalent of Reshape(*shape).forward(x).

    x: (b, t, c) array.  Returns (b, c // prod(shape), t, *shape).

    materialize=False (default): metadata-only reshape, zero HBM traffic.
    materialize=True: route the flat buffer through a Pallas copy (tiled
    lane-dense VMEM copy when the size allows it, chunked HBM->HBM DMA copy
    otherwise) so an explicit buffer copy / fusion break is always honored.
    """
    b, t, c = x.shape
    s_prod = int(math.prod(shape)) if shape else 1
    if c % s_prod != 0:
        raise ValueError("channel dim must be divisible by prod(shape)")
    n = c // s_prod
    out_shape = (b, n, t) + tuple(shape)

    if not materialize:
        # A row-major reshape is free in XLA.
        return x.reshape(out_shape)

    n_elems = b * t * c
    itemsize = jnp.dtype(x.dtype).itemsize
    budget = _vmem_budget_bytes()
    tiling = _choose_tiling(n_elems, itemsize, _block_bytes(budget))

    if tiling is not None:
        rows, lane, block_rows = tiling
        flat = x.reshape(rows, lane)                      # free metadata flatten
        out_flat = _pallas_flat_copy(flat, block_rows, budget)
        return out_flat.reshape(out_shape)                # free re-interpret
    # Sizes not expressible as lane-dense tiles: direct HBM->HBM DMA copy.
    flat = x.reshape(n_elems)
    out_flat = _pallas_hbm_dma_copy(flat)
    return out_flat.reshape(out_shape)


def reshape_reference(x, shape):
    """Pure-JAX reference mirroring torch's x.reshape(b, -1, t, *shape)."""
    b, t, _ = x.shape
    return x.reshape((b, -1, t) + tuple(shape))


if __name__ == "__main__":
    key = jax.random.PRNGKey(0)
    target_shape = (4, 4)  # the *args passed to Reshape.__init__

    # --- Small shape consistent with the module: x is (batch, seq, hidden). ---
    b, t, c = 2, 8, 32
    x_small = jax.random.normal(key, (b, t, c), dtype=jnp.float32)
    out_small = jax.block_until_ready(
        reshape_forward(x_small, target_shape, materialize=True))
    ref_small = reshape_reference(x_small, target_shape)
    assert out_small.shape == ref_small.shape == (b, c // 16, t, 4, 4)
    assert out_small.dtype == ref_small.dtype
    assert jnp.array_equal(out_small, ref_small)

    # Default (recommended) path: free metadata-only reshape.
    out_free = jax.block_until_ready(reshape_forward(x_small, target_shape))
    assert jnp.array_equal(out_free, ref_small)

    # --- Moderately sized f32 input: exercises the multi-block tiled grid. ---
    b2, t2, c2 = 2, 64, 8192  # 4 MiB f32 -> (1024, 1024) flat, >=2 blocks
    x_big = jax.random.normal(jax.random.PRNGKey(0), (b2, t2, c2), jnp.float32)
    out_big = jax.block_until_ready(
        reshape_forward(x_big, target_shape, materialize=True))
    ref_big = reshape_reference(x_big, target_shape)
    assert out_big.shape == ref_big.shape == (b2, c2 // 16, t2, 4, 4)
    assert jnp.array_equal(out_big, ref_big)

    # --- bf16 input: exercises the dtype-aware (16-row) sublane granularity. ---
    x_bf16 = jax.random.normal(
        jax.random.PRNGKey(0), (2, 64, 4096), jnp.float32).astype(jnp.bfloat16)
    out_bf16 = jax.block_until_ready(
        reshape_forward(x_bf16, target_shape, materialize=True))
    assert jnp.array_equal(out_bf16, reshape_reference(x_bf16, target_shape))

    # --- Non-128-divisible sizes: exercises the HBM->HBM DMA path. ---
    x_odd = jax.random.normal(jax.random.PRNGKey(0), (2, 3, 48), jnp.float32)
    out_odd = jax.block_until_ready(
        reshape_forward(x_odd, target_shape, materialize=True))
    assert jnp.array_equal(out_odd, reshape_reference(x_odd, target_shape))

    x_odd_big = jax.random.normal(jax.random.PRNGKey(0), (3, 50, 7000),
                                  jnp.float32)  # 1,050,000 elems (4 DMA chunks)
    out_odd_big = jax.block_until_ready(
        reshape_forward(x_odd_big, (7,), materialize=True))
    assert jnp.array_equal(out_odd_big, reshape_reference(x_odd_big, (7,)))

    print("KERNEL_OK")
</pallas_src>

<mosaic_0001>
module attributes {stable_mosaic.version = 11 : i64} {
  func.func @_copy_kernel(%arg0: i32, %arg1: memref<1x512xf32, #tpu.memory_space<vmem>>, %arg2: memref<1x512xf32, #tpu.memory_space<vmem>>) attributes {dimension_semantics = [#tpu.dimension_semantics<parallel>], iteration_bounds = array<i64: 1>, scalar_prefetch = 0 : i64, scratch_operands = 0 : i64, tpu.core_type = #tpu.core_type<tc>, window_params = [{transform_indices = @transform_0, window_bounds = array<i64: 1, 512>}, {transform_indices = @transform_1, window_bounds = array<i64: 1, 512>}]} {
    %c0 = arith.constant 0 : index
    %c0_0 = arith.constant 0 : index
    %0 = vector.load %arg1[%c0, %c0_0] : memref<1x512xf32, #tpu.memory_space<vmem>>, vector<1x512xf32>
    %c0_1 = arith.constant 0 : index
    %c0_2 = arith.constant 0 : index
    %1 = vector.load %arg2[%c0_1, %c0_2] : memref<1x512xf32, #tpu.memory_space<vmem>>, vector<1x512xf32>
    tpu.vector_store %arg2[%c0_1, %c0_2], %0 {strides = array<i32>} : memref<1x512xf32, #tpu.memory_space<vmem>>, vector<1x512xf32>,
    return
  }
  func.func @transform_0(%arg0: i32) -> (i32, i32) {
    %c0_i32 = arith.constant 0 : i32
    %c0_i32_0 = arith.constant 0 : i32
    return %arg0, %c0_i32 : i32, i32
  }
  func.func @transform_1(%arg0: i32) -> (i32, i32) {
    %c0_i32 = arith.constant 0 : i32
    %c0_i32_0 = arith.constant 0 : i32
    return %arg0, %c0_i32 : i32, i32
  }
}

</mosaic_0001>

<llo_original>
// kernel: tpu_custom_call.1
$region0: #{tpu_custom_call.1}
  #allocation0 [shape = 'u32[]', space=smem, size = 0x4, offset = 0x4, fixed_abs, tag = 'smem constant byte address 0x4 - core index']
  #allocation1 [shape = 'u32[144,128]{1,0:T(1,128)}', space=vmem, size = 0x12000, scoped, tag = 'internal scratch']
  %s0 = inlined_call_operand.hbm [shape: f32[1,512], index: 0, kind: input, shape index: {}]
  %s1 = inlined_call_operand.hbm [shape: f32[1,512], index: 1, kind: output, shape index: {}]
  %s2 = sld [smem:[#allocation0]]
  $region18: #{tpu_custom_call.1} parent=0
    _
  %s4 = ssub.s32 1, %s2
  %s5 = scalar_select 0, %s4, %s2
  $region1: #{tpu_custom_call.1} parent=0
    #allocation2 [shape = 'u8[2048]{0}', space=vmem, size = 0x800, scoped, tag = 'input window, operand 0, single buffered']
    #allocation3 [shape = 's32[1]{0}', space=sflag, size = 0x4, scoped, tag = 'scoped memory for tpu_custom_call.1']
    #allocation4 [shape = 's32[1]{0}', space=sflag, size = 0x4, scoped, tag = 'scoped memory for tpu_custom_call.1']
    #allocation5 [shape = 'u8[2048]{0}', space=vmem, size = 0x800, scoped, tag = 'output window, operand 0, single buffered']
    %6 = vsyncpa [#allocation3], 0
    %7 = vsyncpa [#allocation4], 0
    // Predicated region
    $region2: #{tpu_custom_call.1} parent=1 // pred_check
      _
    $region3: #{tpu_custom_call.1} parent=1 // pred_check_branch
      %9 = sbr.rel (0) target = $region5
    $region4: #{tpu_custom_call.1} parent=1 // pred_region
      %s11 = ssub.s32 64, 64
      %12 = vsyncadd [#allocation3], %s11
      %s14 = sshll.u32 [#allocation2], 4
      %s15 = int_to_ptr.vmem [resolvable:$true] %s14
      %17 = dma.hbm_to_vmem [thread:$0]  %s0, 64, %s15, [#allocation3]
    $region5: #{tpu_custom_call.1} parent=1 // pred_fallthru
      _
    // Predicated region
    $region6: #{tpu_custom_call.1} parent=1 // pred_check
      _
    $region7: #{tpu_custom_call.1} parent=1 // pred_check_branch
      %19 = sbr.rel (0) target = $region9
    $region8: #{tpu_custom_call.1} parent=1 // pred_region
      %20 = dma.done [#allocation3], 64
    $region9: #{tpu_custom_call.1} parent=1 // pred_fallthru
      _
    %v21 = vld [vmem:[#allocation2] sm:$0xf]
    %v22 = vlaneseq
    %vm23 = vcmp.ge.s32.totalorder %v22, 0
    %vm24 = vcmp.lt.s32.totalorder %v22, 512
    %vm25 = vmand %vm23, %vm24
    %26 = vst.msk [vmem:[#allocation5] sm:$0xf] %vm25, %v21
    // Predicated region
    $region10: #{tpu_custom_call.1} parent=1 // pred_check
      _
    $region11: #{tpu_custom_call.1} parent=1 // pred_check_branch
      %28 = sbr.rel (0) target = $region13
    $region12: #{tpu_custom_call.1} parent=1 // pred_region
      %s30 = ssub.s32 64, 64
      %31 = vsyncadd [#allocation4], %s30
      %s33 = sshll.u32 [#allocation5], 4
      %s34 = int_to_ptr.vmem [resolvable:$true] %s33
      %36 = dma.vmem_to_hbm [thread:$0]  %s34, 64, %s1, [#allocation4]
    $region13: #{tpu_custom_call.1} parent=1 // pred_fallthru
      _
    // Predicated region
    $region14: #{tpu_custom_call.1} parent=1 // pred_check
      _
    $region15: #{tpu_custom_call.1} parent=1 // pred_check_branch
      %38 = sbr.rel (0) target = $region17
    $region16: #{tpu_custom_call.1} parent=1 // pred_region
      %39 = dma.done [#allocation4], 64
    $region17: #{tpu_custom_call.1} parent=1 // pred_fallthru
      _
    %40 = vsyncpa [#allocation3], 1
    %41 = vsyncpa [#allocation4], 1

</llo_original>
